<compile_context>
chip_gen: v7x
topology: tpu7x:2x2x1
jax: 0.10.0
libtpu: 0.0.40
codegen_flags: <defaults>
</compile_context>

<pallas_src>
import math

import jax
import jax.numpy as jnp
from jax import lax
from jax.experimental import pallas as pl
from jax.experimental.pallas import tpu as pltpu


def _attn_kernel(q_ref, k_ref, v_ref, o_ref, m_sc, l_sc, acc_sc):
    # q_ref: (TQ, E)   k_ref: (TK, E)   v_ref: (TK, D)   o_ref: (TQ, D)
    ki = pl.program_id(3)

    @pl.when(ki == 0)
    def _():
        m_sc[...] = jnp.full(m_sc.shape, -jnp.inf, dtype=m_sc.dtype)
        l_sc[...] = jnp.zeros(l_sc.shape, dtype=l_sc.dtype)
        acc_sc[...] = jnp.zeros(acc_sc.shape, dtype=acc_sc.dtype)

    q = q_ref[...]          # already scaled by 1/sqrt(E) in the wrapper
    k = k_ref[...]
    v = v_ref[...]

    # scores tile (TQ, TK): bf16 operands, f32 accumulation on the MXU.
    s = lax.dot_general(
        q, k, (((1,), (1,)), ((), ())),
        preferred_element_type=jnp.float32)

    m_prev = m_sc[...]
    m_new = jnp.maximum(m_prev, s.max(axis=-1, keepdims=True))
    alpha = jnp.exp(m_prev - m_new)
    p = jnp.exp(s - m_new)

    l_sc[...] = alpha * l_sc[...] + p.sum(axis=-1, keepdims=True)
    acc_sc[...] = alpha * acc_sc[...] + jnp.dot(
        p.astype(v.dtype), v, preferred_element_type=jnp.float32)
    m_sc[...] = m_new

    @pl.when(ki == pl.num_programs(3) - 1)
    def _():
        inv_l = pl.reciprocal(l_sc[...], approx=True)   # EUP slot, ~free
        o_ref[...] = (acc_sc[...] * inv_l).astype(o_ref.dtype)


def sparse_attention(queries, keys, values, *, tq=None, tk=None,
                     compute_dtype=jnp.bfloat16, kv_buffers=None):
    """Equivalent of SparseAttention.forward at the module defaults.

    Args:
      queries: (B, L, H, E)
      keys:    (B, S, H, E)
      values:  (B, S, H, D)
      tq, tk:  query / key tile sizes (default: min(L,256) / min(S,256);
               pass tk=128 on v5e if sweeping shows it helps)
      compute_dtype: MXU operand dtype (bf16 default; pass jnp.float32 for exact)
      kv_buffers: optional pipeline depth for K/V streaming (e.g. 3) if DMA is
               still exposed after enlarging tiles.
    Returns:
      (B, L, H, D) in queries.dtype
    """
    B, L, H, E = queries.shape
    _, S, _, D = values.shape
    scale = 1.0 / math.sqrt(E)

    # Head-major layout; fold the softmax scale and the compute-dtype cast into
    # these copies so they cost no extra HBM traffic.
    q = (jnp.transpose(queries, (0, 2, 1, 3)) * scale).astype(compute_dtype)
    k = jnp.transpose(keys, (0, 2, 1, 3)).astype(compute_dtype)
    v = jnp.transpose(values, (0, 2, 1, 3)).astype(compute_dtype)

    TQ = tq if tq is not None else min(L, 256)
    TK = tk if tk is not None else min(S, 256)
    # Keep >= 2 units of parallel grid extent so both TensorCores of a v7x chip
    # (and megacore on v5e/v6e) get work when B*H is tiny.
    if tq is None and B * H * (L // TQ) < 2 and TQ % 2 == 0 and L % (TQ // 2) == 0:
        TQ //= 2
    assert L % TQ == 0 and S % TK == 0, "seq lens must tile evenly"

    grid = (B, H, L // TQ, S // TK)

    # Realistic advisory cost: K/V are re-streamed once per query tile.
    in_bytes = jnp.dtype(compute_dtype).itemsize
    out_bytes = jnp.dtype(queries.dtype).itemsize
    n_q_tiles = L // TQ
    cost = pl.CostEstimate(
        flops=2 * B * H * L * S * (E + D),
        transcendentals=B * H * L * S,
        bytes_accessed=(B * H * L * E * in_bytes
                        + B * H * S * E * in_bytes * n_q_tiles
                        + B * H * S * D * in_bytes * n_q_tiles
                        + B * H * L * D * out_bytes),
    )

    kv_mode = {} if kv_buffers is None else dict(pipeline_mode=pl.Buffered(kv_buffers))

    out = pl.pallas_call(
        _attn_kernel,
        out_shape=jax.ShapeDtypeStruct((B, H, L, D), queries.dtype),
        grid_spec=pltpu.PrefetchScalarGridSpec(
            num_scalar_prefetch=0,
            grid=grid,
            in_specs=[
                pl.BlockSpec((None, None, TQ, E),
                             lambda b, h, qi, ki: (b, h, qi, 0)),
                pl.BlockSpec((None, None, TK, E),
                             lambda b, h, qi, ki: (b, h, ki, 0), **kv_mode),
                pl.BlockSpec((None, None, TK, D),
                             lambda b, h, qi, ki: (b, h, ki, 0), **kv_mode),
            ],
            out_specs=pl.BlockSpec(
                (None, None, TQ, D), lambda b, h, qi, ki: (b, h, qi, 0)),
            scratch_shapes=[
                pltpu.VMEM((TQ, 1), jnp.float32),   # running max m
                pltpu.VMEM((TQ, 1), jnp.float32),   # running denom l
                pltpu.VMEM((TQ, D), jnp.float32),   # f32 output accumulator
            ],
        ),
        compiler_params=pltpu.CompilerParams(
            dimension_semantics=("parallel", "parallel", "parallel", "arbitrary"),
        ),
        cost_estimate=cost,
    )(q, k, v)

    # TODO(synk): train-mode nn.Dropout (p=0.1) is stochastic; forward here is
    # eval-mode (identity). relative_bias / causal-mask branches are inactive at
    # the module defaults (use_relative_pos=False, mask_flag=False).
    return jnp.transpose(out, (0, 2, 1, 3))   # back to (B, L, H, D)


def _reference(queries, keys, values):
    B, L, H, E = queries.shape
    scale = 1.0 / math.sqrt(E)
    scores = jnp.einsum('blhe,bshe->bhls', queries, keys)
    A = jax.nn.softmax(scale * scores, axis=-1)
    return jnp.einsum('bhls,bshd->blhd', A, values)


if __name__ == "__main__":
    # Small shapes consistent with the module: (B, L, H, E) attention inputs.
    B, L, S, H, E, D = 2, 8, 8, 2, 32, 32

    key = jax.random.PRNGKey(0)
    kq, kk, kv = jax.random.split(key, 3)
    queries = jax.random.normal(kq, (B, L, H, E), dtype=jnp.float32)
    keys = jax.random.normal(kk, (B, S, H, E), dtype=jnp.float32)
    values = jax.random.normal(kv, (B, S, H, D), dtype=jnp.float32)

    out = sparse_attention(queries, keys, values)
    out = jax.block_until_ready(out)

    ref = _reference(queries, keys, values)
    assert out.shape == (B, L, H, D)
    assert out.dtype == jnp.float32
    # bf16 MXU operands (+ approx reciprocal) -> flash-attention-standard tolerance.
    assert jnp.allclose(out, ref, rtol=2e-2, atol=2e-2), (
        f"max abs err {jnp.max(jnp.abs(out - ref))}")

    print("KERNEL_OK")
</pallas_src>

<mosaic_0001>
module attributes {stable_mosaic.version = 11 : i64} {
  func.func @_attn_kernel(%arg0: i32, %arg1: i32, %arg2: i32, %arg3: i32, %arg4: memref<1x1x8x32xbf16, #tpu.memory_space<vmem>>, %arg5: memref<1x1x8x32xbf16, #tpu.memory_space<vmem>>, %arg6: memref<1x1x8x32xbf16, #tpu.memory_space<vmem>>, %arg7: memref<1x1x8x32xf32, #tpu.memory_space<vmem>>, %arg8: memref<8x1xf32, #tpu.memory_space<vmem>>, %arg9: memref<8x1xf32, #tpu.memory_space<vmem>>, %arg10: memref<8x32xf32, #tpu.memory_space<vmem>>) attributes {dimension_semantics = [#tpu.dimension_semantics<parallel>, #tpu.dimension_semantics<parallel>, #tpu.dimension_semantics<parallel>, #tpu.dimension_semantics<arbitrary>], iteration_bounds = array<i64: 2, 2, 1, 1>, scalar_prefetch = 0 : i64, scratch_operands = 3 : i64, tpu.core_type = #tpu.core_type<tc>, window_params = [{transform_indices = @transform_0, window_bounds = array<i64: 1, 1, 8, 32>}, {transform_indices = @transform_1, window_bounds = array<i64: 1, 1, 8, 32>}, {transform_indices = @transform_2, window_bounds = array<i64: 1, 1, 8, 32>}, {transform_indices = @transform_3, window_bounds = array<i64: 1, 1, 8, 32>}]} {
    %c0_i32 = arith.constant 0 : i32
    %0 = arith.cmpi eq, %arg3, %c0_i32 : i32
    %1 = arith.extui %0 : i1 to i32
    %c0_i32_0 = arith.constant 0 : i32
    %2 = arith.cmpi ne, %1, %c0_i32_0 : i32
    scf.if %2 {
      %cst_29 = arith.constant 0xFF800000 : f32
      %36 = vector.broadcast %cst_29 : f32 to vector<8x1xf32>
      %c0_30 = arith.constant 0 : index
      %c0_31 = arith.constant 0 : index
      %37 = vector.load %arg8[%c0_30, %c0_31] : memref<8x1xf32, #tpu.memory_space<vmem>>, vector<8x1xf32>
      tpu.vector_store %arg8[%c0_30, %c0_31], %36 {strides = array<i32>} : memref<8x1xf32, #tpu.memory_space<vmem>>, vector<8x1xf32>,
      %cst_32 = arith.constant 0.000000e+00 : f32
      %38 = vector.broadcast %cst_32 : f32 to vector<8x1xf32>
      %c0_33 = arith.constant 0 : index
      %c0_34 = arith.constant 0 : index
      %39 = vector.load %arg9[%c0_33, %c0_34] : memref<8x1xf32, #tpu.memory_space<vmem>>, vector<8x1xf32>
      tpu.vector_store %arg9[%c0_33, %c0_34], %38 {strides = array<i32>} : memref<8x1xf32, #tpu.memory_space<vmem>>, vector<8x1xf32>,
      %cst_35 = arith.constant 0.000000e+00 : f32
      %40 = vector.broadcast %cst_35 : f32 to vector<8x32xf32>
      %c0_36 = arith.constant 0 : index
      %c0_37 = arith.constant 0 : index
      %41 = vector.load %arg10[%c0_36, %c0_37] : memref<8x32xf32, #tpu.memory_space<vmem>>, vector<8x32xf32>
      tpu.vector_store %arg10[%c0_36, %c0_37], %40 {strides = array<i32>} : memref<8x32xf32, #tpu.memory_space<vmem>>, vector<8x32xf32>,
    } else {
    }
    %c0 = arith.constant 0 : index
    %c0_1 = arith.constant 0 : index
    %c0_2 = arith.constant 0 : index
    %c0_3 = arith.constant 0 : index
    %3 = vector.load %arg4[%c0, %c0_1, %c0_2, %c0_3] : memref<1x1x8x32xbf16, #tpu.memory_space<vmem>>, vector<1x1x8x32xbf16>
    %4 = vector.shape_cast %3 : vector<1x1x8x32xbf16> to vector<8x32xbf16>
    %c0_4 = arith.constant 0 : index
    %c0_5 = arith.constant 0 : index
    %c0_6 = arith.constant 0 : index
    %c0_7 = arith.constant 0 : index
    %5 = vector.load %arg5[%c0_4, %c0_5, %c0_6, %c0_7] : memref<1x1x8x32xbf16, #tpu.memory_space<vmem>>, vector<1x1x8x32xbf16>
    %6 = vector.shape_cast %5 : vector<1x1x8x32xbf16> to vector<8x32xbf16>
    %c0_8 = arith.constant 0 : index
    %c0_9 = arith.constant 0 : index
    %c0_10 = arith.constant 0 : index
    %c0_11 = arith.constant 0 : index
    %7 = vector.load %arg6[%c0_8, %c0_9, %c0_10, %c0_11] : memref<1x1x8x32xbf16, #tpu.memory_space<vmem>>, vector<1x1x8x32xbf16>
    %8 = vector.shape_cast %7 : vector<1x1x8x32xbf16> to vector<8x32xbf16>
    %cst = arith.constant dense<0.000000e+00> : vector<8x8xf32>
    %9 = tpu.matmul %4, %6, %cst {dimension_numbers = #tpu.dot_dimension_numbers<[1], [1], [0], [0], [0, 0, 1, 0], [], []>} : vector<8x32xbf16>, vector<8x32xbf16>, vector<8x8xf32> -> vector<8x8xf32>
    %c0_12 = arith.constant 0 : index
    %c0_13 = arith.constant 0 : index
    %10 = vector.load %arg8[%c0_12, %c0_13] : memref<8x1xf32, #tpu.memory_space<vmem>>, vector<8x1xf32>
    %cst_14 = arith.constant dense<0xFF800000> : vector<8xf32>
    %11 = vector.multi_reduction <maximumf>, %9, %cst_14 [1] : vector<8x8xf32> to vector<8xf32>
    %12 = vector.shape_cast %11 : vector<8xf32> to vector<8x1xf32>
    %13 = arith.maximumf %10, %12 : vector<8x1xf32>
    %14 = arith.subf %10, %13 : vector<8x1xf32>
    %15 = math.exp %14 : vector<8x1xf32>
    %16 = vector.broadcast %13 : vector<8x1xf32> to vector<8x8xf32>
    %17 = arith.subf %9, %16 : vector<8x8xf32>
    %18 = math.exp %17 : vector<8x8xf32>
    %c0_15 = arith.constant 0 : index
    %c0_16 = arith.constant 0 : index
    %19 = vector.load %arg9[%c0_15, %c0_16] : memref<8x1xf32, #tpu.memory_space<vmem>>, vector<8x1xf32>
    %20 = arith.mulf %15, %19 : vector<8x1xf32>
    %cst_17 = arith.constant dense<0.000000e+00> : vector<8xf32>
    %21 = vector.multi_reduction <add>, %18, %cst_17 [1] : vector<8x8xf32> to vector<8xf32>
    %22 = vector.shape_cast %21 : vector<8xf32> to vector<8x1xf32>
    %23 = arith.addf %20, %22 : vector<8x1xf32>
    %c0_18 = arith.constant 0 : index
    %c0_19 = arith.constant 0 : index
    %24 = vector.load %arg9[%c0_18, %c0_19] : memref<8x1xf32, #tpu.memory_space<vmem>>, vector<8x1xf32>
    tpu.vector_store %arg9[%c0_18, %c0_19], %23 {strides = array<i32>} : memref<8x1xf32, #tpu.memory_space<vmem>>, vector<8x1xf32>,
    %c0_20 = arith.constant 0 : index
    %c0_21 = arith.constant 0 : index
    %25 = vector.load %arg10[%c0_20, %c0_21] : memref<8x32xf32, #tpu.memory_space<vmem>>, vector<8x32xf32>
    %26 = vector.broadcast %15 : vector<8x1xf32> to vector<8x32xf32>
    %27 = arith.mulf %26, %25 : vector<8x32xf32>
    %28 = arith.truncf %18 : vector<8x8xf32> to vector<8x8xbf16>
    %cst_22 = arith.constant dense<0.000000e+00> : vector<8x32xf32>
    %29 = tpu.matmul %28, %8, %cst_22 {dimension_numbers = #tpu.dot_dimension_numbers<[1], [0], [0], [1], [0, 0, 1, 1], [], []>} : vector<8x8xbf16>, vector<8x32xbf16>, vector<8x32xf32> -> vector<8x32xf32>
    %30 = arith.addf %27, %29 : vector<8x32xf32>
    %c0_23 = arith.constant 0 : index
    %c0_24 = arith.constant 0 : index
    %31 = vector.load %arg10[%c0_23, %c0_24] : memref<8x32xf32, #tpu.memory_space<vmem>>, vector<8x32xf32>
    tpu.vector_store %arg10[%c0_23, %c0_24], %30 {strides = array<i32>} : memref<8x32xf32, #tpu.memory_space<vmem>>, vector<8x32xf32>,
    %c0_25 = arith.constant 0 : index
    %c0_26 = arith.constant 0 : index
    %32 = vector.load %arg8[%c0_25, %c0_26] : memref<8x1xf32, #tpu.memory_space<vmem>>, vector<8x1xf32>
    tpu.vector_store %arg8[%c0_25, %c0_26], %13 {strides = array<i32>} : memref<8x1xf32, #tpu.memory_space<vmem>>, vector<8x1xf32>,
    %c0_i32_27 = arith.constant 0 : i32
    %33 = arith.cmpi eq, %arg3, %c0_i32_27 : i32
    %34 = arith.extui %33 : i1 to i32
    %c0_i32_28 = arith.constant 0 : i32
    %35 = arith.cmpi ne, %34, %c0_i32_28 : i32
    scf.if %35 {
      %c0_29 = arith.constant 0 : index
      %c0_30 = arith.constant 0 : index
      %36 = vector.load %arg9[%c0_29, %c0_30] : memref<8x1xf32, #tpu.memory_space<vmem>>, vector<8x1xf32>
      %37 = tpu.reciprocal %36 {approx = true} : vector<8x1xf32> -> vector<8x1xf32>
      %c0_31 = arith.constant 0 : index
      %c0_32 = arith.constant 0 : index
      %38 = vector.load %arg10[%c0_31, %c0_32] : memref<8x32xf32, #tpu.memory_space<vmem>>, vector<8x32xf32>
      %39 = vector.broadcast %37 : vector<8x1xf32> to vector<8x32xf32>
      %40 = arith.mulf %38, %39 : vector<8x32xf32>
      %c0_33 = arith.constant 0 : index
      %c0_34 = arith.constant 0 : index
      %c0_35 = arith.constant 0 : index
      %c0_36 = arith.constant 0 : index
      %41 = vector.load %arg7[%c0_33, %c0_34, %c0_35, %c0_36] : memref<1x1x8x32xf32, #tpu.memory_space<vmem>>, vector<1x1x8x32xf32>
      %42 = vector.shape_cast %41 : vector<1x1x8x32xf32> to vector<8x32xf32>
      %43 = vector.shape_cast %40 : vector<8x32xf32> to vector<1x1x8x32xf32>
      tpu.vector_store %arg7[%c0_33, %c0_34, %c0_35, %c0_36], %43 {strides = array<i32>} : memref<1x1x8x32xf32, #tpu.memory_space<vmem>>, vector<1x1x8x32xf32>,
    } else {
    }
    return
  }
  func.func @transform_0(%arg0: i32, %arg1: i32, %arg2: i32, %arg3: i32) -> (i32, i32, i32, i32) {
    %c0_i32 = arith.constant 0 : i32
    %c0_i32_0 = arith.constant 0 : i32
    return %arg0, %arg1, %arg2, %c0_i32 : i32, i32, i32, i32
  }
  func.func @transform_1(%arg0: i32, %arg1: i32, %arg2: i32, %arg3: i32) -> (i32, i32, i32, i32) {
    %c0_i32 = arith.constant 0 : i32
    %c0_i32_0 = arith.constant 0 : i32
    return %arg0, %arg1, %arg3, %c0_i32 : i32, i32, i32, i32
  }
  func.func @transform_2(%arg0: i32, %arg1: i32, %arg2: i32, %arg3: i32) -> (i32, i32, i32, i32) {
    %c0_i32 = arith.constant 0 : i32
    %c0_i32_0 = arith.constant 0 : i32
    return %arg0, %arg1, %arg3, %c0_i32 : i32, i32, i32, i32
  }
  func.func @transform_3(%arg0: i32, %arg1: i32, %arg2: i32, %arg3: i32) -> (i32, i32, i32, i32) {
    %c0_i32 = arith.constant 0 : i32
    %c0_i32_0 = arith.constant 0 : i32
    return %arg0, %arg1, %arg2, %c0_i32 : i32, i32, i32, i32
  }
}

</mosaic_0001>

<llo_original>
// kernel: tpu_custom_call.1
$region0: #{tpu_custom_call.1}
  #allocation0 [shape = 'u32[]', space=smem, size = 0x4, offset = 0x4, fixed_abs, tag = 'smem constant byte address 0x4 - core index']
  #allocation1 [shape = 'u32[144,128]{1,0:T(1,128)}', space=vmem, size = 0x12000, scoped, tag = 'internal scratch']
  #allocation2 [shape = 'f32[8,1]{1,0:T(8,128)}', space=vmem, size = 0x1000, scoped, tag = 'scratch operand']
  #allocation3 [shape = 'f32[8,1]{1,0:T(8,128)}', space=vmem, size = 0x1000, scoped, tag = 'scratch operand']
  #allocation4 [shape = 'f32[8,32]{1,0:T(8,128)}', space=vmem, size = 0x1000, scoped, tag = 'scratch operand']
  %s0 = inlined_call_operand.hbm [shape: bf16[2,2,8,32], index: 0, kind: input, shape index: {}]
  %s1 = inlined_call_operand.hbm [shape: bf16[2,2,8,32], index: 1, kind: input, shape index: {}]
  %s2 = inlined_call_operand.hbm [shape: bf16[2,2,8,32], index: 2, kind: input, shape index: {}]
  %s3 = inlined_call_operand.hbm [shape: f32[2,2,8,32], index: 3, kind: output, shape index: {}]
  %s4 = sld [smem:[#allocation0]]
  $region65: #{tpu_custom_call.1} parent=0
    _
  %s6 = ssub.s32 1, %s4
  %s7 = scalar_select 0, %s6, %s4
  $region1: #{tpu_custom_call.1} parent=0
    #allocation5 [shape = 'u8[4096]{0}', space=vmem, size = 0x1000, scoped, tag = 'input window, operand 0']
    #allocation6 [shape = 's32[2]{0}', space=sflag, size = 0x8, scoped, tag = 'scoped memory for tpu_custom_call.1']
    #allocation7 [shape = 's32[2]{0}', space=sflag, size = 0x8, scoped, tag = 'scoped memory for tpu_custom_call.1']
    #allocation8 [shape = 'u8[4096]{0}', space=vmem, size = 0x1000, scoped, tag = 'input window, operand 1']
    #allocation9 [shape = 's32[2]{0}', space=sflag, size = 0x8, scoped, tag = 'scoped memory for tpu_custom_call.1']
    #allocation10 [shape = 'u8[4096]{0}', space=vmem, size = 0x1000, scoped, tag = 'input window, operand 2']
    #allocation11 [shape = 'u8[8192]{0}', space=vmem, size = 0x2000, scoped, tag = 'output window, operand 0']
    %8 = vsyncpa [#allocation6], 0
    %s9 = scalar_lea.sflag [#allocation6], 1
    %10 = vsyncpa %s9, 0
    %11 = vsyncpa [#allocation9], 0
    %s12 = scalar_lea.sflag [#allocation9], 1
    %13 = vsyncpa %s12, 0
    %14 = vsyncpa [#allocation7], 0
    %s15 = scalar_lea.sflag [#allocation7], 1
    %16 = vsyncpa %s15, 0
    loop: start=0, step=1, limit=6
    $region2: #{tpu_custom_call.1} parent=1 // loop_pre_header
      _
    $region3: #{tpu_custom_call.1} parent=1 // loop_header
      %s18 = sphi 0, %s22
      %p19 = scmp.ge.s32.totalorder %s18, 6
      %s25 = sphi 0, %s51
      %s26 = sphi 0, %s47
      %s27 = sphi 0, %s43
      %s28 = sphi 0, %s39
      %s29 = sphi 0, %s25
      %s30 = sphi 0, %s26
      %s31 = sphi 0, %s27
      %s32 = sphi 0, %s28
      %s33 = sphi 0, %s29
      %s34 = sphi 0, %s30
      %s35 = sphi 0, %s31
      %s36 = sphi 0, %s32
      %s58 = sphi 0, %s60
      %s61 = sphi 0, %s58
      %s62 = sphi 0, %s61
      %s78 = sphi 0, %s62
      %s88 = sphi 0, %s90
      %s91 = sphi 0, %s88
      %s92 = sphi 0, %s91
      %s108 = sphi 0, %s92
      %s118 = sphi 0, %s120
      %s121 = sphi 0, %s118
      %s122 = sphi 0, %s121
      %s138 = sphi 0, %s122
      %s148 = sphi 0, %s150
      %s151 = sphi 0, %s148
      %s152 = sphi 0, %s151
      %s168 = sphi 0, %s152
    $region4: #{tpu_custom_call.1} parent=1 // loop_header_branch
      %21 = sbr.rel (%p19) target = $region8
    $region5: #{tpu_custom_call.1} parent=1 // loop_body
      %s23 = ssub.s32 %s18, 1
      %s24 = ssub.s32 %s18, 2
      %s37 = sadd.s32 1, %s28
      %p38 = scmp.ge.s32.totalorder %s37, 1
      %s39 = scalar_select %p38, 0, %s37
      %s40 = sadd.s32 1, %s27
      %s41 = scalar_select %p38, %s40, %s27
      %p42 = scmp.ge.s32.totalorder %s41, 1
      %s43 = scalar_select %p42, 0, %s41
      %s44 = sadd.s32 1, %s26
      %s45 = scalar_select %p42, %s44, %s26
      %p46 = scmp.ge.s32.totalorder %s45, 2
      %s47 = scalar_select %p46, 0, %s45
      %s48 = sadd.s32 1, %s25
      %s49 = scalar_select %p46, %s48, %s25
      %p50 = scmp.ge.s32.totalorder %s49, 2
      %s51 = scalar_select %p50, 0, %s49
      %s52 = ssub.s32 %s25, %s51
      %s53 = ssub.s32 %s26, %s47
      %s54 = sor.u32 %s52, %s53
      %s55 = ssub.s32 %s27, %s43
      %s56 = sor.u32 %s54, %s55
      %p57 = scmp.eq.s32.totalorder %s56, 0
      %s59 = sadd.s32 %s58, 1
      %s60 = scalar_select %p57, %s58, %s59
      %p63 = pneg %p57
      %p64 = scmp.eq.s32.totalorder %s18, 3
      %p65 = por %p63, %p64
      %p66 = scmp.ne.s32.totalorder %s58, %s61
      %p67 = scmp.eq.s32.totalorder %s18, 0
      %p68 = por %p66, %p67
      %p69 = scmp.ne.s32.totalorder %s58, %s61
      %p70 = scmp.eq.s32.totalorder %s23, 3
      %p71 = por %p69, %p70
      %p72 = scmp.ne.s32.totalorder %s61, %s62
      %p73 = scmp.eq.s32.totalorder %s23, 0
      %p74 = por %p72, %p73
      %p75 = scmp.ne.s32.totalorder %s61, %s62
      %p76 = scmp.eq.s32.totalorder %s24, 3
      %p77 = por %p75, %p76
      %p79 = scmp.ne.s32.totalorder %s62, %s78
      %p80 = scmp.eq.s32.totalorder %s24, 0
      %p81 = por %p79, %p80
      %s82 = ssub.s32 %s25, %s51
      %s83 = ssub.s32 %s26, %s47
      %s84 = sor.u32 %s82, %s83
      %s85 = ssub.s32 %s28, %s39
      %s86 = sor.u32 %s84, %s85
      %p87 = scmp.eq.s32.totalorder %s86, 0
      %s89 = sadd.s32 %s88, 1
      %s90 = scalar_select %p87, %s88, %s89
      %p93 = pneg %p87
      %p94 = scmp.eq.s32.totalorder %s18, 3
      %p95 = por %p93, %p94
      %p96 = scmp.ne.s32.totalorder %s88, %s91
      %p97 = scmp.eq.s32.totalorder %s18, 0
      %p98 = por %p96, %p97
      %p99 = scmp.ne.s32.totalorder %s88, %s91
      %p100 = scmp.eq.s32.totalorder %s23, 3
      %p101 = por %p99, %p100
      %p102 = scmp.ne.s32.totalorder %s91, %s92
      %p103 = scmp.eq.s32.totalorder %s23, 0
      %p104 = por %p102, %p103
      %p105 = scmp.ne.s32.totalorder %s91, %s92
      %p106 = scmp.eq.s32.totalorder %s24, 3
      %p107 = por %p105, %p106
      %p109 = scmp.ne.s32.totalorder %s92, %s108
      %p110 = scmp.eq.s32.totalorder %s24, 0
      %p111 = por %p109, %p110
      %s112 = ssub.s32 %s25, %s51
      %s113 = ssub.s32 %s26, %s47
      %s114 = sor.u32 %s112, %s113
      %s115 = ssub.s32 %s28, %s39
      %s116 = sor.u32 %s114, %s115
      %p117 = scmp.eq.s32.totalorder %s116, 0
      %s119 = sadd.s32 %s118, 1
      %s120 = scalar_select %p117, %s118, %s119
      %p123 = pneg %p117
      %p124 = scmp.eq.s32.totalorder %s18, 3
      %p125 = por %p123, %p124
      %p126 = scmp.ne.s32.totalorder %s118, %s121
      %p127 = scmp.eq.s32.totalorder %s18, 0
      %p128 = por %p126, %p127
      %p129 = scmp.ne.s32.totalorder %s118, %s121
      %p130 = scmp.eq.s32.totalorder %s23, 3
      %p131 = por %p129, %p130
      %p132 = scmp.ne.s32.totalorder %s121, %s122
      %p133 = scmp.eq.s32.totalorder %s23, 0
      %p134 = por %p132, %p133
      %p135 = scmp.ne.s32.totalorder %s121, %s122
      %p136 = scmp.eq.s32.totalorder %s24, 3
      %p137 = por %p135, %p136
      %p139 = scmp.ne.s32.totalorder %s122, %s138
      %p140 = scmp.eq.s32.totalorder %s24, 0
      %p141 = por %p139, %p140
      %s142 = ssub.s32 %s25, %s51
      %s143 = ssub.s32 %s26, %s47
      %s144 = sor.u32 %s142, %s143
      %s145 = ssub.s32 %s27, %s43
      %s146 = sor.u32 %s144, %s145
      %p147 = scmp.eq.s32.totalorder %s146, 0
      %s149 = sadd.s32 %s148, 1
      %s150 = scalar_select %p147, %s148, %s149
      %p153 = pneg %p147
      %p154 = scmp.eq.s32.totalorder %s18, 3
      %p155 = por %p153, %p154
      %p156 = scmp.ne.s32.totalorder %s148, %s151
      %p157 = scmp.eq.s32.totalorder %s18, 0
      %p158 = por %p156, %p157
      %p159 = scmp.ne.s32.totalorder %s148, %s151
      %p160 = scmp.eq.s32.totalorder %s23, 3
      %p161 = por %p159, %p160
      %p162 = scmp.ne.s32.totalorder %s151, %s152
      %p163 = scmp.eq.s32.totalorder %s23, 0
      %p164 = por %p162, %p163
      %p165 = scmp.ne.s32.totalorder %s151, %s152
      %p166 = scmp.eq.s32.totalorder %s24, 3
      %p167 = por %p165, %p166
      %p169 = scmp.ne.s32.totalorder %s152, %s168
      %p170 = scmp.eq.s32.totalorder %s24, 0
      %p171 = por %p169, %p170
      %p172 = scmp.le.s32.totalorder 1, %s18
      %p173 = scmp.lt.s32.totalorder %s18, 5
      %p174 = pnand %p172, %p173
      %p175 = pneg %p174
      // Predicated region
      $region9: #{tpu_custom_call.1} parent=5 // pred_check
        _
      $region10: #{tpu_custom_call.1} parent=5 // pred_check_branch
        %177 = sbr.rel (%p174) target = $region12
      $region11: #{tpu_custom_call.1} parent=5 // pred_region
        %s178 = ssub.s32 %s18, 1
      $region12: #{tpu_custom_call.1} parent=5 // pred_fallthru
        _
      %p179 = scmp.lt.s32.totalorder %s18, 4
      // Predicated region
      $region13: #{tpu_custom_call.1} parent=5 // pred_check
        %p180 = pneg %p179
      $region14: #{tpu_custom_call.1} parent=5 // pred_check_branch
        %182 = sbr.rel (%p180) target = $region16
      $region15: #{tpu_custom_call.1} parent=5 // pred_region
        // Predicated region
        $region17: #{tpu_custom_call.1} parent=15 // pred_check
          %p183 = pneg %p68
        $region18: #{tpu_custom_call.1} parent=15 // pred_check_branch
          %185 = sbr.rel (%p183) target = $region20
        $region19: #{tpu_custom_call.1} parent=15 // pred_region
          %s186 = sand.u32 %s58, 1
          %s187 = scalar_lea.sflag [#allocation6], %s186
          %s188 = sand.u32 %s58, 1
          %s189 = smul.addr %s188, 4
          %s190 = scalar_lea.vmem [#allocation5], %s189
          %s192 = ssub.s32 64, 64
          %193 = vsyncadd %s187, %s192
          %s194 = sadd.s32 %s27, %s26
          %s195 = smul.addr %s25, 2
          %s196 = sadd.s32 %s194, %s195
          %s197 = smul.addr %s196, 64
          %s198 = scalar_lea.hbm %s0, %s197
          %s200 = sshll.u32 %s190, 4
          %s201 = int_to_ptr.vmem [resolvable:$true] %s200
          %203 = dma.hbm_to_vmem [thread:$0]  %s198, 64, %s201, %s187
        $region20: #{tpu_custom_call.1} parent=15 // pred_fallthru
          _
        // Predicated region
        $region21: #{tpu_custom_call.1} parent=15 // pred_check
          %p204 = pneg %p98
        $region22: #{tpu_custom_call.1} parent=15 // pred_check_branch
          %206 = sbr.rel (%p204) target = $region24
        $region23: #{tpu_custom_call.1} parent=15 // pred_region
          %s207 = sand.u32 %s18, 1
          %s208 = scalar_lea.sflag [#allocation9], %s207
          %s209 = sand.u32 %s88, 1
          %s210 = smul.addr %s209, 4
          %s211 = scalar_lea.vmem [#allocation8], %s210
          %s213 = ssub.s32 64, 64
          %214 = vsyncadd %s208, %s213
          %s215 = sadd.s32 %s28, %s26
          %s216 = smul.addr %s25, 2
          %s217 = sadd.s32 %s215, %s216
          %s218 = smul.addr %s217, 64
          %s219 = scalar_lea.hbm %s1, %s218
          %s221 = sshll.u32 %s211, 4
          %s222 = int_to_ptr.vmem [resolvable:$true] %s221
          %224 = dma.hbm_to_vmem [thread:$0]  %s219, 64, %s222, %s208
        $region24: #{tpu_custom_call.1} parent=15 // pred_fallthru
          _
        // Predicated region
        $region25: #{tpu_custom_call.1} parent=15 // pred_check
          %p225 = pneg %p128
        $region26: #{tpu_custom_call.1} parent=15 // pred_check_branch
          %227 = sbr.rel (%p225) target = $region28
        $region27: #{tpu_custom_call.1} parent=15 // pred_region
          %s228 = sand.u32 %s18, 1
          %s229 = scalar_lea.sflag [#allocation9], %s228
          %s230 = sand.u32 %s118, 1
          %s231 = smul.addr %s230, 4
          %s232 = scalar_lea.vmem [#allocation10], %s231
          %s234 = ssub.s32 64, 64
          %235 = vsyncadd %s229, %s234
          %s236 = sadd.s32 %s28, %s26
          %s237 = smul.addr %s25, 2
          %s238 = sadd.s32 %s236, %s237
          %s239 = smul.addr %s238, 64
          %s240 = scalar_lea.hbm %s2, %s239
          %s242 = sshll.u32 %s232, 4
          %s243 = int_to_ptr.vmem [resolvable:$true] %s242
          %245 = dma.hbm_to_vmem [thread:$0]  %s240, 64, %s243, %s229
        $region28: #{tpu_custom_call.1} parent=15 // pred_fallthru
          _
      $region16: #{tpu_custom_call.1} parent=5 // pred_fallthru
        _
      %p246 = scmp.le.s32.totalorder 1, %s18
      %p247 = scmp.lt.s32.totalorder %s18, 5
      %p248 = pnand %p246, %p247
      %p249 = pneg %p248
      // Predicated region
      $region29: #{tpu_custom_call.1} parent=5 // pred_check
        _
      $region30: #{tpu_custom_call.1} parent=5 // pred_check_branch
        %251 = sbr.rel (%p248) target = $region32
      $region31: #{tpu_custom_call.1} parent=5 // pred_region
        %s252 = ssub.s32 %s18, 1
        %s253 = sand.u32 %s61, 1
        %s254 = scalar_lea.sflag [#allocation6], %s253
        %s255 = sand.u32 %s61, 1
        %s256 = smul.addr %s255, 4
        %s257 = scalar_lea.vmem [#allocation5], %s256
        // Predicated region
        $region33: #{tpu_custom_call.1} parent=31 // pred_check
          %p258 = pneg %p74
        $region34: #{tpu_custom_call.1} parent=31 // pred_check_branch
          %260 = sbr.rel (%p258) target = $region36
        $region35: #{tpu_custom_call.1} parent=31 // pred_region
          %261 = dma.done %s254, 64
        $region36: #{tpu_custom_call.1} parent=31 // pred_fallthru
          _
        %s262 = sand.u32 %s23, 1
        %s263 = scalar_lea.sflag [#allocation9], %s262
        %s264 = sand.u32 %s91, 1
        %s265 = smul.addr %s264, 4
        %s266 = scalar_lea.vmem [#allocation8], %s265
        // Predicated region
        $region37: #{tpu_custom_call.1} parent=31 // pred_check
          %p267 = pneg %p104
        $region38: #{tpu_custom_call.1} parent=31 // pred_check_branch
          %269 = sbr.rel (%p267) target = $region40
        $region39: #{tpu_custom_call.1} parent=31 // pred_region
          %270 = dma.done %s263, 64
        $region40: #{tpu_custom_call.1} parent=31 // pred_fallthru
          _
        %s271 = sand.u32 %s23, 1
        %s272 = scalar_lea.sflag [#allocation9], %s271
        %s273 = sand.u32 %s121, 1
        %s274 = smul.addr %s273, 4
        %s275 = scalar_lea.vmem [#allocation10], %s274
        // Predicated region
        $region41: #{tpu_custom_call.1} parent=31 // pred_check
          %p276 = pneg %p134
        $region42: #{tpu_custom_call.1} parent=31 // pred_check_branch
          %278 = sbr.rel (%p276) target = $region44
        $region43: #{tpu_custom_call.1} parent=31 // pred_region
          %279 = dma.done %s272, 64
        $region44: #{tpu_custom_call.1} parent=31 // pred_fallthru
          _
        %s280 = sand.u32 %s61, 1
        %s281 = scalar_lea.sflag [#allocation6], %s280
        %s282 = sand.u32 %s61, 1
        %s283 = smul.addr %s282, 4
        %s284 = scalar_lea.vmem [#allocation5], %s283
        %p285 = pneg %p74
        %p286 = pneg %p71
        %s287 = sand.u32 %s23, 1
        %s288 = scalar_lea.sflag [#allocation9], %s287
        %s289 = sand.u32 %s91, 1
        %s290 = smul.addr %s289, 4
        %s291 = scalar_lea.vmem [#allocation8], %s290
        %p292 = pneg %p104
        %p293 = pneg %p101
        %s294 = sand.u32 %s23, 1
        %s295 = scalar_lea.sflag [#allocation9], %s294
        %s296 = sand.u32 %s121, 1
        %s297 = smul.addr %s296, 4
        %s298 = scalar_lea.vmem [#allocation10], %s297
        %p299 = pneg %p134
        %p300 = pneg %p131
        %p301 = pneg %p164
        %p302 = pneg %p161
        %s303 = sand.u32 %s151, 1
        %s304 = scalar_lea.sflag [#allocation7], %s303
        %s305 = sand.u32 %s151, 1
        %s306 = smul.addr %s305, 8
        %s307 = scalar_lea.vmem [#allocation11], %s306
        %p309 = scmp.eq.s32.totalorder %s32, 0
        // Predicated region
        $region45: #{tpu_custom_call.1} parent=31 // pred_check
          %p310 = pneg %p309
        $region46: #{tpu_custom_call.1} parent=31 // pred_check_branch
          %312 = sbr.rel (%p310) target = $region48
        $region47: #{tpu_custom_call.1} parent=31 // pred_region
          %vm313 = vcmask 7168
          %314 = vst.msk [vmem:[#allocation2] sm:$0xff] %vm313, -inf
          %315 = vst.msk [vmem:[#allocation3] sm:$0xff] %vm313, 0.0
          %vm316 = vcmask 261120
          %317 = vst.msk [vmem:[#allocation4] sm:$0xff] %vm316, 0.0
        $region48: #{tpu_custom_call.1} parent=31 // pred_fallthru
          _
        %v318 = vld [vmem:[%s257] sm:$0xf]
        %v319 = vld [vmem:[%s266] sm:$0xf]
        %v320 = vld [vmem:[%s275] sm:$0xf]
        %vm321 = vcmask 261120
        %v323 = vsel %vm321, %v318, 0
        %v326 = vsel %vm321, %v319, 0
        %328 = vmatprep.subr.bf16.mxu0 0
        %329 = vmatpush1.bf16.xpose.msra.mxu0 %v326
        %330 = vmatprep.subr.bf16.mxu0 0
        %331 = vmatpush1.bf16.xpose.msra.mxu0 0
        %332 = vmatprep.subr.bf16.mxu0 0
        %333 = vmatpush1.bf16.xpose.msra.mxu0 0
        %334 = vmatprep.subr.bf16.mxu0 0
        %335 = vmatpush1.bf16.xpose.msra.mxu0 0
        %336 = vmatprep.subr.bf16.mxu0 0
        %337 = vmatpush1.bf16.xpose.msra.mxu0 0
        %338 = vmatprep.subr.bf16.mxu0 0
        %339 = vmatpush1.bf16.xpose.msra.mxu0 0
        %340 = vmatprep.subr.bf16.mxu0 0
        %341 = vmatpush1.bf16.xpose.msra.mxu0 0
        %342 = vmatprep.subr.bf16.mxu0 0
        %343 = vmatpush1.bf16.xpose.msra.mxu0 0
        %344 = vmatprep.subr.bf16.mxu0 0
        %345 = vmatpush1.bf16.xpose.msra.mxu0 0
        %346 = vmatprep.subr.bf16.mxu0 0
        %347 = vmatpush1.bf16.xpose.msra.mxu0 0
        %348 = vmatprep.subr.bf16.mxu0 0
        %349 = vmatpush1.bf16.xpose.msra.mxu0 0
        %350 = vmatprep.subr.bf16.mxu0 0
        %351 = vmatpush1.bf16.xpose.msra.mxu0 0
        %352 = vmatprep.subr.bf16.mxu0 0
        %353 = vmatpush1.bf16.xpose.msra.mxu0 0
        %354 = vmatprep.subr.bf16.mxu0 0
        %355 = vmatpush1.bf16.xpose.msra.mxu0 0
        %356 = vmatprep.subr.bf16.mxu0 0
        %357 = vmatpush1.bf16.xpose.msra.mxu0 0
        %358 = vmatprep.subr.bf16.mxu0 0
        %359 = vmatpush1.bf16.xpose.msra.mxu0 0
        %360 = vmatprep.mubr.bf16.mxu0 0
        %361 = vmatmul.mubr.bf16.gmra.mrb[0].mxu0 %v323
        %v362 = vpop.f32.mrb[0].mxu0
        %v363 = vadd.f32 0.0, %v362
        %v364 = vpop.f32.mrb[0].mxu0
        %v365 = vpop.f32.mrb[0].mxu0
        %v366 = vpop.f32.mrb[0].mxu0
        %367 = vdwg.mxu0
        %v368 = vld [vmem:[#allocation2] sm:$0xff]
        %vm369 = vcmask 64512
        %v370 = vsel %vm369, %v363, -inf
        %371 = vmax.xlane.f32.xlu0 %v370
        %v372 = vpop.xlane.xlu0 %371
        %v373 = vmax.f32 %v368, %v372
        %v374 = vsub.f32 %v368, %v373
        %v375 = vmul.f32 %v374, 1.442695
        %v376 = vpow.pop %v375
        %378 = vset.pattern.permute.xlu0 0
        %379 = vperm.xlu0 %378, %v373
        %v380 = vpop.permute.xlu0 %379
        %v382 = vsub.f32 %v363, %v380
        %v383 = vmul.f32 %v382, 1.442695
        %v384 = vpow.pop %v383
        %v385 = vld [vmem:[#allocation3] sm:$0xff]
        %v386 = vmul.f32 %v376, %v385
        %v387 = vsel %vm369, %v384, 0.0
        %388 = vadd.xlane.f32.xlu0 %v387
        %v389 = vpop.xlane.xlu0 %388
        %v390 = vadd.f32 %v386, %v389
        %vm391 = vcmask 7168
        %392 = vst.msk [vmem:[#allocation3] sm:$0xff] %vm391, %v390
        %v393 = vld [vmem:[#allocation4] sm:$0xff]
        %395 = vset.pattern.permute.xlu0 0
        %396 = vperm.xlu0 %395, %v376
        %v397 = vpop.permute.xlu0 %396
        %v399 = vmul.f32 %v397, %v393
        %v400 = vpack.c.bf16 %v384, %v384
        %v402 = vsel %vm369, %v400, 0
        %vm404 = vcmask 1043456
        %v406 = vsel %vm404, %v320, 0
        %408 = vmatprep.subr.bf16.mxu0 0
        %409 = vmatpush1.bf16.msra.mxu0 %v406
        %410 = vmatprep.subr.bf16.mxu0 0
        %411 = vmatpush1.bf16.msra.mxu0 0
        %412 = vmatprep.subr.bf16.mxu0 0
        %413 = vmatpush1.bf16.msra.mxu0 0
        %414 = vmatprep.subr.bf16.mxu0 0
        %415 = vmatpush1.bf16.msra.mxu0 0
        %416 = vmatprep.subr.bf16.mxu0 0
        %417 = vmatpush1.bf16.msra.mxu0 0
        %418 = vmatprep.subr.bf16.mxu0 0
        %419 = vmatpush1.bf16.msra.mxu0 0
        %420 = vmatprep.subr.bf16.mxu0 0
        %421 = vmatpush1.bf16.msra.mxu0 0
        %422 = vmatprep.subr.bf16.mxu0 0
        %423 = vmatpush1.bf16.msra.mxu0 0
        %424 = vmatprep.subr.bf16.mxu0 0
        %425 = vmatpush1.bf16.msra.mxu0 0
        %426 = vmatprep.subr.bf16.mxu0 0
        %427 = vmatpush1.bf16.msra.mxu0 0
        %428 = vmatprep.subr.bf16.mxu0 0
        %429 = vmatpush1.bf16.msra.mxu0 0
        %430 = vmatprep.subr.bf16.mxu0 0
        %431 = vmatpush1.bf16.msra.mxu0 0
        %432 = vmatprep.subr.bf16.mxu0 0
        %433 = vmatpush1.bf16.msra.mxu0 0
        %434 = vmatprep.subr.bf16.mxu0 0
        %435 = vmatpush1.bf16.msra.mxu0 0
        %436 = vmatprep.subr.bf16.mxu0 0
        %437 = vmatpush1.bf16.msra.mxu0 0
        %438 = vmatprep.subr.bf16.mxu0 0
        %439 = vmatpush1.bf16.msra.mxu0 0
        %440 = vmatprep.mubr.bf16.mxu0 0
        %441 = vmatmul.mubr.bf16.gmra.mrb[0].mxu0 %v402
        %v442 = vpop.f32.mrb[0].mxu0
        %v443 = vadd.f32 0.0, %v442
        %v444 = vpop.f32.mrb[0].mxu0
        %v445 = vpop.f32.mrb[0].mxu0
        %v446 = vpop.f32.mrb[0].mxu0
        %447 = vdwg.mxu0
        %v448 = vadd.f32 %v399, %v443
        %449 = vst.msk [vmem:[#allocation4] sm:$0xff] %vm321, %v448
        %450 = vst.msk [vmem:[#allocation2] sm:$0xff] %vm391, %v373
        // Predicated region
        $region49: #{tpu_custom_call.1} parent=31 // pred_check
          %p451 = pneg %p309
        $region50: #{tpu_custom_call.1} parent=31 // pred_check_branch
          %453 = sbr.rel (%p451) target = $region52
        $region51: #{tpu_custom_call.1} parent=31 // pred_region
          %v454 = vld [vmem:[#allocation3] sm:$0xff]
          %v455 = vrcp.pop %v454
          %v456 = vld [vmem:[#allocation4] sm:$0xff]
          %458 = vset.pattern.permute.xlu0 0
          %459 = vperm.xlu0 %458, %v455
          %v460 = vpop.permute.xlu0 %459
          %v462 = vmul.f32 %v456, %v460
          %463 = vst.msk [vmem:[%s307] sm:$0xff] %vm321, %v462
        $region52: #{tpu_custom_call.1} parent=31 // pred_fallthru
          _
        %s464 = sand.u32 %s151, 1
        %s465 = scalar_lea.sflag [#allocation7], %s464
        %s466 = sand.u32 %s151, 1
        %s467 = smul.addr %s466, 8
        %s468 = scalar_lea.vmem [#allocation11], %s467
        // Predicated region
        $region53: #{tpu_custom_call.1} parent=31 // pred_check
          %p469 = pneg %p161
        $region54: #{tpu_custom_call.1} parent=31 // pred_check_branch
          %471 = sbr.rel (%p469) target = $region56
        $region55: #{tpu_custom_call.1} parent=31 // pred_region
          %s473 = ssub.s32 128, 128
          %474 = vsyncadd %s465, %s473
          %s475 = sadd.s32 %s31, %s30
          %s476 = smul.addr %s29, 2
          %s477 = sadd.s32 %s475, %s476
          %s478 = smul.addr %s477, 128
          %s479 = scalar_lea.hbm %s3, %s478
          %s481 = sshll.u32 %s468, 4
          %s482 = int_to_ptr.vmem [resolvable:$true] %s481
          %484 = dma.vmem_to_hbm [thread:$0]  %s482, 128, %s479, %s465
        $region56: #{tpu_custom_call.1} parent=31 // pred_fallthru
          _
      $region32: #{tpu_custom_call.1} parent=5 // pred_fallthru
        _
      %p485 = scmp.le.s32.totalorder 2, %s18
      // Predicated region
      $region57: #{tpu_custom_call.1} parent=5 // pred_check
        %p486 = pneg %p485
      $region58: #{tpu_custom_call.1} parent=5 // pred_check_branch
        %488 = sbr.rel (%p486) target = $region60
      $region59: #{tpu_custom_call.1} parent=5 // pred_region
        %s489 = ssub.s32 %s18, 2
        // Predicated region
        $region61: #{tpu_custom_call.1} parent=59 // pred_check
          %p490 = pneg %p167
        $region62: #{tpu_custom_call.1} parent=59 // pred_check_branch
          %492 = sbr.rel (%p490) target = $region64
        $region63: #{tpu_custom_call.1} parent=59 // pred_region
          %s493 = sand.u32 %s152, 1
          %s494 = scalar_lea.sflag [#allocation7], %s493
          %s495 = sand.u32 %s152, 1
          %s496 = smul.addr %s495, 8
          %s497 = scalar_lea.vmem [#allocation11], %s496
          %498 = dma.done %s494, 128
        $region64: #{tpu_custom_call.1} parent=59 // pred_fallthru
          _
      $region60: #{tpu_custom_call.1} parent=5 // pred_fallthru
        _
    $region6: #{tpu_custom_call.1} parent=1 // loop_footer
      %s22 = sadd.s32 1, %s18
    $region7: #{tpu_custom_call.1} parent=1 // loop_footer_branch
      %17 = sbr.rel target = $region3
    $region8: #{tpu_custom_call.1} parent=1 // loop_exit
      _
    %499 = vsyncpa [#allocation6], 1
    %s500 = scalar_lea.sflag [#allocation6], 1
    %501 = vsyncpa %s500, 1
    %502 = vsyncpa [#allocation9], 1
    %s503 = scalar_lea.sflag [#allocation9], 1
    %504 = vsyncpa %s503, 1
    %505 = vsyncpa [#allocation7], 1
    %s506 = scalar_lea.sflag [#allocation7], 1
    %507 = vsyncpa %s506, 1

</llo_original>
